<compile_context>
chip_gen: v5e
topology: v5e:2x2
jax: 0.10.0
libtpu: 0.0.40
codegen_flags: <defaults>
</compile_context>

<pallas_src>
import jax
import jax.numpy as jnp
from jax.experimental import pallas as pl
from jax.experimental.pallas import tpu as pltpu

EPS = 1e-5
LANE = 128
SUBLANE = 8


# ------------------------------- small utils --------------------------------

def _round_up(x, m):
    return (x + m - 1) // m * m


def _pad2d(a, rows, cols):
    r, c = a.shape
    return jnp.pad(a, ((0, rows - r), (0, cols - c)))


def _vmem_limit_bytes():
    """Generation-aware VMEM budget (75% of physical, capped at 96 MiB)."""
    cap = 64 * 1024 * 1024                       # v7x floor if the query fails
    try:
        cap = int(pltpu.get_tpu_info().vmem_capacity_bytes)
    except Exception:                            # pragma: no cover - fallback
        pass
    return min(int(cap * 3 // 4), 96 * 1024 * 1024)


def _choose_tile_m(m, per_row_bytes, const_bytes, budget):
    """Largest row tile that (a) fits the VMEM budget and (b) leaves >=4 grid
    steps when possible (>=2 per TensorCore on a v7x megacore split)."""
    m8 = _round_up(m, SUBLANE)
    cands = [t for t in (1024, 512, 256, 128, 64, 32, 16, 8)
             if t <= m8 and const_bytes + per_row_bytes * t <= budget]
    if not cands:
        return SUBLANE
    for min_steps in (4, 2, 1):
        for t in cands:                          # descending
            if -(-m8 // t) >= min_steps:
                return t
    return cands[-1]


def _compiler_params(vmem_limit):
    return pltpu.CompilerParams(
        dimension_semantics=("parallel",),       # M tiles are independent
        vmem_limit_bytes=int(vmem_limit),
    )


def _row_spec(tile_m, cols):
    return pl.BlockSpec((tile_m, cols), lambda i: (i, 0))


def _const_spec(rows, cols):
    # Block index never changes across the grid -> single buffer saves VMEM.
    try:
        return pl.BlockSpec((rows, cols), lambda i: (0, 0),
                            pipeline_mode=pl.Buffered(1))
    except (TypeError, AttributeError):
        return pl.BlockSpec((rows, cols), lambda i: (0, 0))


# ------------------------------ Pallas kernels -------------------------------

def conv_stats_kernel(p_ref, w_ref, y_ref, stats_ref):
    """Single pass: y = P @ W (stored bf16) plus per-tile column sum (sublane 0)
    and column sum-of-squares (sublane 1), computed from the f32 accumulator."""
    y = jnp.dot(p_ref[...], w_ref[...], preferred_element_type=jnp.float32)
    y_ref[...] = y.astype(y_ref.dtype)
    s1 = jnp.sum(y, axis=0, keepdims=True)           # (1, C)
    s2 = jnp.sum(y * y, axis=0, keepdims=True)       # (1, C)
    row = jax.lax.broadcasted_iota(jnp.int32, stats_ref.shape, 0)
    stats_ref[...] = jnp.where(row == 0, s1, jnp.where(row == 1, s2, 0.0))


def bn_add_relu_kernel(y_ref, res_ref, scale_ref, shift_ref, o_ref):
    """relu(bn2(y) + residual): identity-shortcut epilogue (f32 math, bf16 I/O)."""
    y = y_ref[...].astype(jnp.float32)
    r = res_ref[...].astype(jnp.float32)
    o_ref[...] = jnp.maximum(y * scale_ref[...] + shift_ref[...] + r,
                             0.0).astype(o_ref.dtype)


def bn2_add_relu_kernel(y_ref, ys_ref, scale_ref, scale_s_ref, shift_ref, o_ref):
    """relu(bn2(y) + bn_sc(y_sc)): projection-shortcut epilogue
    (shifts pre-combined in the wrapper)."""
    y = y_ref[...].astype(jnp.float32)
    s = ys_ref[...].astype(jnp.float32)
    o_ref[...] = jnp.maximum(
        y * scale_ref[...] + s * scale_s_ref[...] + shift_ref[...],
        0.0).astype(o_ref.dtype)


# --------------------------- conv / BN building blocks ------------------------

def _conv_matmul_stats(p, w_mat, tile_m, m_pad, vmem_limit):
    """One pallas_call: y (m_pad, c_pad) bf16 and per-channel (sum, sumsq)."""
    k_pad = p.shape[1]
    c_pad = w_mat.shape[1]
    nt = m_pad // tile_m
    cost = pl.CostEstimate(
        flops=2 * m_pad * k_pad * c_pad,
        transcendentals=0,
        bytes_accessed=p.size * 2 + w_mat.size * 2
        + m_pad * c_pad * 2 + nt * SUBLANE * c_pad * 4)
    y, stats = pl.pallas_call(
        conv_stats_kernel,
        grid=(nt,),
        in_specs=[_row_spec(tile_m, k_pad), _const_spec(k_pad, c_pad)],
        out_specs=(_row_spec(tile_m, c_pad),
                   pl.BlockSpec((SUBLANE, c_pad), lambda i: (i, 0))),
        out_shape=(jax.ShapeDtypeStruct((m_pad, c_pad), jnp.bfloat16),
                   jax.ShapeDtypeStruct((nt * SUBLANE, c_pad), jnp.float32)),
        compiler_params=_compiler_params(vmem_limit),
        cost_estimate=cost,
    )(p, w_mat)
    parts = stats.reshape(nt, SUBLANE, c_pad)
    return y, parts[:, 0, :].sum(axis=0), parts[:, 1, :].sum(axis=0)


def _bn_scale_shift(colsum, colsq, m_real, gamma, beta, c_pad):
    """Training-mode BN (batch stats) as an affine (scale, shift) per channel.
    Padded rows of the patch matrix are all-zero, so they add 0 to both sums
    and dividing by the real row count stays exact."""
    cout = gamma.shape[0]
    mean = colsum[:cout] / m_real
    var = jnp.maximum(colsq[:cout] / m_real - mean * mean, 0.0)
    scale = gamma * jax.lax.rsqrt(var + EPS)
    shift = beta - mean * scale
    scale_pad = jnp.zeros((1, c_pad), jnp.float32).at[0, :cout].set(scale)
    shift_pad = jnp.zeros((1, c_pad), jnp.float32).at[0, :cout].set(shift)
    return scale_pad, shift_pad


def _w_mat(w_oihw, k_pad, c_pad):
    # (Cout, Cin, kh, kw) -> (kh*kw*Cin, Cout), matching patch column order.
    cout = w_oihw.shape[0]
    w = jnp.transpose(w_oihw, (2, 3, 1, 0)).reshape(-1, cout)
    return _pad2d(w, k_pad, c_pad).astype(jnp.bfloat16)


def _extract_patches(x_nhwc, ksize, stride, pad):
    """im2col: (N,H,W,C) -> (N*Ho*Wo, ksize*ksize*C), kh/kw outer, channel inner."""
    n, h, w, c = x_nhwc.shape
    xp = jnp.pad(x_nhwc, ((0, 0), (pad, pad), (pad, pad), (0, 0)))
    ho = (h + 2 * pad - ksize) // stride + 1
    wo = (w + 2 * pad - ksize) // stride + 1
    cols = []
    for kh in range(ksize):
        for kw in range(ksize):
            cols.append(xp[:, kh:kh + (ho - 1) * stride + 1:stride,
                           kw:kw + (wo - 1) * stride + 1:stride, :])
    patches = jnp.concatenate(cols, axis=-1)
    return patches.reshape(n * ho * wo, ksize * ksize * c), (n, ho, wo)


# --------------------------------- forward ------------------------------------

def basic_block_forward(x_nchw, params, *, stride):
    # NCHW <-> NHWC only at the module boundary (PyTorch layout fidelity).
    x = jnp.transpose(x_nchw, (0, 2, 3, 1)).astype(jnp.float32)
    n, h, w, cin = x.shape
    cout = params["conv1_w"].shape[0]
    c_pad = _round_up(cout, LANE)
    proj = (stride != 1) or (cin != cout)

    vmem_limit = _vmem_limit_bytes()

    # One shared (M, C) row count for every stage (conv2 keeps spatial dims).
    p1, (n_, ho, wo) = _extract_patches(x, 3, stride, 1)
    m = n_ * ho * wo
    k1_pad = _round_up(p1.shape[1], LANE)
    k2_pad = _round_up(9 * cout, LANE)

    # Generation-aware row tile, budgeted against the fattest kernel
    # (double-buffered patch tile + y tile, single-buffered weight + stats).
    per_row = (max(k1_pad, k2_pad) + c_pad) * 2 * 2        # bf16, 2 buffers
    const_b = max(k1_pad, k2_pad) * c_pad * 2 + 2 * SUBLANE * c_pad * 4
    tile_m = _choose_tile_m(m, per_row, const_b, vmem_limit)
    m_pad = _round_up(m, tile_m)
    nt = m_pad // tile_m

    # ---------------- stage 1: conv1 (3x3, stride) + batch stats -------------
    p1p = _pad2d(p1, m_pad, k1_pad).astype(jnp.bfloat16)
    w1 = _w_mat(params["conv1_w"], k1_pad, c_pad)
    y1, s1, q1 = _conv_matmul_stats(p1p, w1, tile_m, m_pad, vmem_limit)
    scale1, shift1 = _bn_scale_shift(s1, q1, m, params["bn1_g"],
                                     params["bn1_b"], c_pad)

    # bn1-apply + relu is elementwise, so it fuses into the (XLA) im2col pass
    # that builds conv2's patches -- no extra HBM round trip / Pallas pass.
    out1 = jnp.maximum(y1[:m, :cout].astype(jnp.float32) * scale1[0, :cout]
                       + shift1[0, :cout], 0.0)
    out1_nhwc = out1.reshape(n_, ho, wo, cout)

    # ---------------- stage 2: conv2 (3x3, s=1) + batch stats ----------------
    p2, _ = _extract_patches(out1_nhwc, 3, 1, 1)
    p2p = _pad2d(p2, m_pad, k2_pad).astype(jnp.bfloat16)
    w2 = _w_mat(params["conv2_w"], k2_pad, c_pad)
    y2, s2, q2 = _conv_matmul_stats(p2p, w2, tile_m, m_pad, vmem_limit)
    scale2, shift2 = _bn_scale_shift(s2, q2, m, params["bn2_g"],
                                     params["bn2_b"], c_pad)

    # ---------------- epilogue: bn2 + shortcut + relu (elementwise) ----------
    if proj:
        # projection shortcut: 1x1 stride conv + BN (single matmul+stats pass)
        cs_pad = _round_up(cin, LANE)
        xs = x[:, ::stride, ::stride, :].reshape(m, cin)
        xsp = _pad2d(xs, m_pad, cs_pad).astype(jnp.bfloat16)
        wsc = _w_mat(params["sc_w"], cs_pad, c_pad)
        ys, ss, qs = _conv_matmul_stats(xsp, wsc, tile_m, m_pad, vmem_limit)
        scale_s, shift_s = _bn_scale_shift(ss, qs, m, params["sc_bn_g"],
                                           params["sc_bn_b"], c_pad)
        shift_tot = shift2 + shift_s
        cost = pl.CostEstimate(
            flops=5 * m_pad * c_pad, transcendentals=0,
            bytes_accessed=3 * m_pad * c_pad * 2 + 3 * c_pad * 4)
        out = pl.pallas_call(
            bn2_add_relu_kernel,
            grid=(nt,),
            in_specs=[_row_spec(tile_m, c_pad), _row_spec(tile_m, c_pad),
                      _const_spec(1, c_pad), _const_spec(1, c_pad),
                      _const_spec(1, c_pad)],
            out_specs=_row_spec(tile_m, c_pad),
            out_shape=jax.ShapeDtypeStruct((m_pad, c_pad), jnp.bfloat16),
            compiler_params=_compiler_params(vmem_limit),
            cost_estimate=cost,
        )(y2, ys, scale2, scale_s, shift_tot)
    else:
        # identity shortcut: residual streamed in bf16, f32 epilogue math
        resp = _pad2d(x.reshape(m, cout), m_pad, c_pad).astype(jnp.bfloat16)
        cost = pl.CostEstimate(
            flops=4 * m_pad * c_pad, transcendentals=0,
            bytes_accessed=3 * m_pad * c_pad * 2 + 2 * c_pad * 4)
        out = pl.pallas_call(
            bn_add_relu_kernel,
            grid=(nt,),
            in_specs=[_row_spec(tile_m, c_pad), _row_spec(tile_m, c_pad),
                      _const_spec(1, c_pad), _const_spec(1, c_pad)],
            out_specs=_row_spec(tile_m, c_pad),
            out_shape=jax.ShapeDtypeStruct((m_pad, c_pad), jnp.bfloat16),
            compiler_params=_compiler_params(vmem_limit),
            cost_estimate=cost,
        )(y2, resp, scale2, shift2)

    out = out[:m, :cout].astype(jnp.float32).reshape(n_, ho, wo, cout)
    return jnp.transpose(out, (0, 3, 1, 2))   # back to NCHW, f32


# ----------------------------- pure-JAX reference -----------------------------

def _ref_bn(y, g, b):
    mean = y.mean(axis=(0, 2, 3), keepdims=True)
    var = ((y - mean) ** 2).mean(axis=(0, 2, 3), keepdims=True)
    return (y - mean) * jax.lax.rsqrt(var + EPS) * g.reshape(1, -1, 1, 1) \
        + b.reshape(1, -1, 1, 1)


def ref_forward(x, params, stride):
    dn = jax.lax.conv_dimension_numbers(
        x.shape, params["conv1_w"].shape, ("NCHW", "OIHW", "NCHW"))
    hi = jax.lax.Precision.HIGHEST
    y = jax.lax.conv_general_dilated(
        x, params["conv1_w"], (stride, stride), ((1, 1), (1, 1)),
        dimension_numbers=dn, precision=hi)
    y = jnp.maximum(_ref_bn(y, params["bn1_g"], params["bn1_b"]), 0.0)
    y2 = jax.lax.conv_general_dilated(
        y, params["conv2_w"], (1, 1), ((1, 1), (1, 1)),
        dimension_numbers=dn, precision=hi)
    y2 = _ref_bn(y2, params["bn2_g"], params["bn2_b"])
    cin, cout = x.shape[1], params["conv1_w"].shape[0]
    if stride != 1 or cin != cout:
        s = jax.lax.conv_general_dilated(
            x, params["sc_w"], (stride, stride), ((0, 0), (0, 0)),
            dimension_numbers=dn, precision=hi)
        s = _ref_bn(s, params["sc_bn_g"], params["sc_bn_b"])
    else:
        s = x
    return jnp.maximum(y2 + s, 0.0)


# ------------------------------------ main -------------------------------------

if __name__ == "__main__":
    def make_params(key, cin, cout, proj):
        ks = jax.random.split(key, 8)
        p = {
            "conv1_w": 0.1 * jax.random.normal(ks[0], (cout, cin, 3, 3), jnp.float32),
            "bn1_g": 1.0 + 0.1 * jax.random.normal(ks[1], (cout,), jnp.float32),
            "bn1_b": 0.1 * jax.random.normal(ks[2], (cout,), jnp.float32),
            "conv2_w": 0.1 * jax.random.normal(ks[3], (cout, cout, 3, 3), jnp.float32),
            "bn2_g": 1.0 + 0.1 * jax.random.normal(ks[4], (cout,), jnp.float32),
            "bn2_b": 0.1 * jax.random.normal(ks[5], (cout,), jnp.float32),
        }
        if proj:
            p["sc_w"] = 0.1 * jax.random.normal(ks[6], (cout, cin, 1, 1), jnp.float32)
            p["sc_bn_g"] = 1.0 + 0.1 * jax.random.normal(ks[7], (cout,), jnp.float32)
            p["sc_bn_b"] = jnp.zeros((cout,), jnp.float32)
        return p

    fwd = jax.jit(basic_block_forward, static_argnames=("stride",))

    key = jax.random.PRNGKey(0)
    k_p1, k_x1, k_p2, k_x2 = jax.random.split(key, 4)

    # case 1: projection shortcut (stride 2, channel expansion 4 -> 8)
    params1 = make_params(k_p1, 4, 8, proj=True)
    x1 = jax.random.normal(k_x1, (2, 4, 16, 16), jnp.float32)
    out1 = jax.block_until_ready(fwd(x1, params1, stride=2))
    ref1 = jax.block_until_ready(ref_forward(x1, params1, 2))
    assert out1.shape == ref1.shape, (out1.shape, ref1.shape)
    err1 = float(jnp.max(jnp.abs(out1 - ref1)))
    # bf16 MXU operands / bf16 activation streams + f32 accumulation:
    # 2e-2 tolerance absorbs the casts
    assert jnp.allclose(out1, ref1, atol=2e-2, rtol=2e-2), err1

    # case 2: identity shortcut (stride 1, 8 -> 8)
    params2 = make_params(k_p2, 8, 8, proj=False)
    x2 = jax.random.normal(k_x2, (2, 8, 16, 16), jnp.float32)
    out2 = jax.block_until_ready(fwd(x2, params2, stride=1))
    ref2 = jax.block_until_ready(ref_forward(x2, params2, 1))
    assert out2.shape == ref2.shape, (out2.shape, ref2.shape)
    err2 = float(jnp.max(jnp.abs(out2 - ref2)))
    assert jnp.allclose(out2, ref2, atol=2e-2, rtol=2e-2), err2

    print("KERNEL_OK")
</pallas_src>

<mosaic_0001>
module attributes {stable_mosaic.version = 11 : i64} {
  func.func @conv_stats_kernel(%arg0: i32, %arg1: memref<32x128xbf16, #tpu.memory_space<vmem>>, %arg2: memref<128x128xbf16, #tpu.memory_space<vmem>>, %arg3: memref<32x128xbf16, #tpu.memory_space<vmem>>, %arg4: memref<8x128xf32, #tpu.memory_space<vmem>>) attributes {dimension_semantics = [#tpu.dimension_semantics<parallel>], iteration_bounds = array<i64: 4>, scalar_prefetch = 0 : i64, scratch_operands = 0 : i64, tpu.core_type = #tpu.core_type<tc>, window_params = [{transform_indices = @transform_0, window_bounds = array<i64: 32, 128>}, {pipeline_mode = #tpu.pipeline_mode<synchronous>, transform_indices = @transform_1, window_bounds = array<i64: 128, 128>}, {transform_indices = @transform_2, window_bounds = array<i64: 32, 128>}, {transform_indices = @transform_3, window_bounds = array<i64: 8, 128>}]} {
    %c0 = arith.constant 0 : index
    %c0_0 = arith.constant 0 : index
    %0 = vector.load %arg1[%c0, %c0_0] : memref<32x128xbf16, #tpu.memory_space<vmem>>, vector<32x128xbf16>
    %c0_1 = arith.constant 0 : index
    %c0_2 = arith.constant 0 : index
    %1 = vector.load %arg2[%c0_1, %c0_2] : memref<128x128xbf16, #tpu.memory_space<vmem>>, vector<128x128xbf16>
    %cst = arith.constant dense<0.000000e+00> : vector<32x128xf32>
    %2 = tpu.matmul %0, %1, %cst {dimension_numbers = #tpu.dot_dimension_numbers<[1], [0], [0], [1], [0, 0, 1, 1], [], []>} : vector<32x128xbf16>, vector<128x128xbf16>, vector<32x128xf32> -> vector<32x128xf32>
    %3 = arith.truncf %2 : vector<32x128xf32> to vector<32x128xbf16>
    %c0_3 = arith.constant 0 : index
    %c0_4 = arith.constant 0 : index
    %4 = vector.load %arg3[%c0_3, %c0_4] : memref<32x128xbf16, #tpu.memory_space<vmem>>, vector<32x128xbf16>
    tpu.vector_store %arg3[%c0_3, %c0_4], %3 {strides = array<i32>} : memref<32x128xbf16, #tpu.memory_space<vmem>>, vector<32x128xbf16>,
    %cst_5 = arith.constant dense<0.000000e+00> : vector<128xf32>
    %5 = vector.multi_reduction <add>, %2, %cst_5 [0] : vector<32x128xf32> to vector<128xf32>
    %6 = vector.shape_cast %5 : vector<128xf32> to vector<1x128xf32>
    %7 = arith.mulf %2, %2 : vector<32x128xf32>
    %cst_6 = arith.constant dense<0.000000e+00> : vector<128xf32>
    %8 = vector.multi_reduction <add>, %7, %cst_6 [0] : vector<32x128xf32> to vector<128xf32>
    %9 = vector.shape_cast %8 : vector<128xf32> to vector<1x128xf32>
    %10 = tpu.iota {dimensions = array<i32: 0>} : vector<8x128xi32>
    %c0_i32 = arith.constant 0 : i32
    %11 = vector.broadcast %c0_i32 : i32 to vector<8x128xi32>
    %12 = arith.cmpi eq, %10, %11 : vector<8x128xi32>
    %c1_i32 = arith.constant 1 : i32
    %13 = vector.broadcast %c1_i32 : i32 to vector<8x128xi32>
    %14 = arith.cmpi eq, %10, %13 : vector<8x128xi32>
    %cst_7 = arith.constant 0.000000e+00 : f32
    %15 = vector.shape_cast %9 : vector<1x128xf32> to vector<1x128xf32>
    %16 = vector.broadcast %15 : vector<1x128xf32> to vector<8x128xf32>
    %17 = vector.broadcast %cst_7 : f32 to vector<8x128xf32>
    %18 = arith.select %14, %16, %17 : vector<8x128xi1>, vector<8x128xf32>
    %19 = vector.shape_cast %6 : vector<1x128xf32> to vector<1x128xf32>
    %20 = vector.broadcast %19 : vector<1x128xf32> to vector<8x128xf32>
    %21 = arith.select %12, %20, %18 : vector<8x128xi1>, vector<8x128xf32>
    %c0_8 = arith.constant 0 : index
    %c0_9 = arith.constant 0 : index
    %22 = vector.load %arg4[%c0_8, %c0_9] : memref<8x128xf32, #tpu.memory_space<vmem>>, vector<8x128xf32>
    tpu.vector_store %arg4[%c0_8, %c0_9], %21 {strides = array<i32>} : memref<8x128xf32, #tpu.memory_space<vmem>>, vector<8x128xf32>,
    return
  }
  func.func @transform_0(%arg0: i32) -> (i32, i32) {
    %c0_i32 = arith.constant 0 : i32
    %c0_i32_0 = arith.constant 0 : i32
    return %arg0, %c0_i32 : i32, i32
  }
  func.func @transform_1(%arg0: i32) -> (i32, i32) {
    %c0_i32 = arith.constant 0 : i32
    %c0_i32_0 = arith.constant 0 : i32
    %c0_i32_1 = arith.constant 0 : i32
    return %c0_i32, %c0_i32_0 : i32, i32
  }
  func.func @transform_2(%arg0: i32) -> (i32, i32) {
    %c0_i32 = arith.constant 0 : i32
    %c0_i32_0 = arith.constant 0 : i32
    return %arg0, %c0_i32 : i32, i32
  }
  func.func @transform_3(%arg0: i32) -> (i32, i32) {
    %c0_i32 = arith.constant 0 : i32
    %c0_i32_0 = arith.constant 0 : i32
    return %arg0, %c0_i32 : i32, i32
  }
}

module attributes {stable_mosaic.version = 11 : i64} {
  func.func @bn2_add_relu_kernel(%arg0: i32, %arg1: memref<32x128xbf16, #tpu.memory_space<vmem>>, %arg2: memref<32x128xbf16, #tpu.memory_space<vmem>>, %arg3: memref<1x128xf32, #tpu.memory_space<vmem>>, %arg4: memref<1x128xf32, #tpu.memory_space<vmem>>, %arg5: memref<1x128xf32, #tpu.memory_space<vmem>>, %arg6: memref<32x128xbf16, #tpu.memory_space<vmem>>) attributes {dimension_semantics = [#tpu.dimension_semantics<parallel>], iteration_bounds = array<i64: 4>, scalar_prefetch = 0 : i64, scratch_operands = 0 : i64, tpu.core_type = #tpu.core_type<tc>, window_params = [{transform_indices = @transform_0, window_bounds = array<i64: 32, 128>}, {transform_indices = @transform_1, window_bounds = array<i64: 32, 128>}, {pipeline_mode = #tpu.pipeline_mode<synchronous>, transform_indices = @transform_2, window_bounds = array<i64: 1, 128>}, {pipeline_mode = #tpu.pipeline_mode<synchronous>, transform_indices = @transform_3, window_bounds = array<i64: 1, 128>}, {pipeline_mode = #tpu.pipeline_mode<synchronous>, transform_indices = @transform_4, window_bounds = array<i64: 1, 128>}, {transform_indices = @transform_5, window_bounds = array<i64: 32, 128>}]} {
    %c0 = arith.constant 0 : index
    %c0_0 = arith.constant 0 : index
    %0 = vector.load %arg1[%c0, %c0_0] : memref<32x128xbf16, #tpu.memory_space<vmem>>, vector<32x128xbf16>
    %1 = arith.extf %0 : vector<32x128xbf16> to vector<32x128xf32>
    %c0_1 = arith.constant 0 : index
    %c0_2 = arith.constant 0 : index
    %2 = vector.load %arg2[%c0_1, %c0_2] : memref<32x128xbf16, #tpu.memory_space<vmem>>, vector<32x128xbf16>
    %3 = arith.extf %2 : vector<32x128xbf16> to vector<32x128xf32>
    %c0_3 = arith.constant 0 : index
    %c0_4 = arith.constant 0 : index
    %4 = vector.load %arg3[%c0_3, %c0_4] : memref<1x128xf32, #tpu.memory_space<vmem>>, vector<1x128xf32>
    %5 = vector.broadcast %4 : vector<1x128xf32> to vector<32x128xf32>
    %6 = arith.mulf %1, %5 : vector<32x128xf32>
    %c0_5 = arith.constant 0 : index
    %c0_6 = arith.constant 0 : index
    %7 = vector.load %arg4[%c0_5, %c0_6] : memref<1x128xf32, #tpu.memory_space<vmem>>, vector<1x128xf32>
    %8 = vector.broadcast %7 : vector<1x128xf32> to vector<32x128xf32>
    %9 = arith.mulf %3, %8 : vector<32x128xf32>
    %10 = arith.addf %6, %9 : vector<32x128xf32>
    %c0_7 = arith.constant 0 : index
    %c0_8 = arith.constant 0 : index
    %11 = vector.load %arg5[%c0_7, %c0_8] : memref<1x128xf32, #tpu.memory_space<vmem>>, vector<1x128xf32>
    %12 = vector.broadcast %11 : vector<1x128xf32> to vector<32x128xf32>
    %13 = arith.addf %10, %12 : vector<32x128xf32>
    %cst = arith.constant 0.000000e+00 : f32
    %14 = vector.broadcast %cst : f32 to vector<32x128xf32>
    %15 = arith.maximumf %13, %14 : vector<32x128xf32>
    %16 = arith.truncf %15 : vector<32x128xf32> to vector<32x128xbf16>
    %c0_9 = arith.constant 0 : index
    %c0_10 = arith.constant 0 : index
    %17 = vector.load %arg6[%c0_9, %c0_10] : memref<32x128xbf16, #tpu.memory_space<vmem>>, vector<32x128xbf16>
    tpu.vector_store %arg6[%c0_9, %c0_10], %16 {strides = array<i32>} : memref<32x128xbf16, #tpu.memory_space<vmem>>, vector<32x128xbf16>,
    return
  }
  func.func @transform_0(%arg0: i32) -> (i32, i32) {
    %c0_i32 = arith.constant 0 : i32
    %c0_i32_0 = arith.constant 0 : i32
    return %arg0, %c0_i32 : i32, i32
  }
  func.func @transform_1(%arg0: i32) -> (i32, i32) {
    %c0_i32 = arith.constant 0 : i32
    %c0_i32_0 = arith.constant 0 : i32
    return %arg0, %c0_i32 : i32, i32
  }
  func.func @transform_2(%arg0: i32) -> (i32, i32) {
    %c0_i32 = arith.constant 0 : i32
    %c0_i32_0 = arith.constant 0 : i32
    %c0_i32_1 = arith.constant 0 : i32
    return %c0_i32, %c0_i32_0 : i32, i32
  }
  func.func @transform_3(%arg0: i32) -> (i32, i32) {
    %c0_i32 = arith.constant 0 : i32
    %c0_i32_0 = arith.constant 0 : i32
    %c0_i32_1 = arith.constant 0 : i32
    return %c0_i32, %c0_i32_0 : i32, i32
  }
  func.func @transform_4(%arg0: i32) -> (i32, i32) {
    %c0_i32 = arith.constant 0 : i32
    %c0_i32_0 = arith.constant 0 : i32
    %c0_i32_1 = arith.constant 0 : i32
    return %c0_i32, %c0_i32_0 : i32, i32
  }
  func.func @transform_5(%arg0: i32) -> (i32, i32) {
    %c0_i32 = arith.constant 0 : i32
    %c0_i32_0 = arith.constant 0 : i32
    return %arg0, %c0_i32 : i32, i32
  }
}

</mosaic_0001>

<llo_original>
// kernel: basic_block_forward.6
$region0: #{basic_block_forward.6}
  #allocation0 [shape = 'u32[]', space=smem, size = 0x4, offset = 0x4, fixed_abs, tag = 'smem constant byte address 0x4 - core index']
  #allocation1 [shape = 'u32[72,128]{1,0:T(1,128)}', space=vmem, size = 0x9000, scoped, tag = 'internal scratch']
  %s0 = inlined_call_operand.vmem [shape: bf16[128,128], index: 0, kind: input, shape index: {}]
  %s1 = inlined_call_operand.vmem [shape: bf16[128,128], index: 1, kind: input, shape index: {}]
  %s2 = inlined_call_operand.vmem [shape: bf16[128,128], index: 2, kind: output, shape index: {0}]
  %s3 = inlined_call_operand.vmem [shape: f32[32,128], index: 3, kind: output, shape index: {1}]
  %4 = xla_tuple %s2, %s3
  %s5 = sld [smem:[#allocation0]]
  $region49: #{basic_block_forward.6} parent=0
    _
  %s7 = ssub.s32 1, %s5
  %s8 = scalar_select 0, %s7, %s5
  loop: start=0, step=1, limit=6
  $region2: #{basic_block_forward.6} parent=0 // loop_pre_header
    _
  $region3: #{basic_block_forward.6} parent=0 // loop_header
    %s10 = sphi 0, %s14
    %p11 = scmp.ge.s32.totalorder %s10, 6
    %s20 = sphi 0, %s22
    %s23 = sphi 0, %s20
    %s24 = sphi 0, %s23
    %s40 = sphi 0, %s24
    %s44 = sphi 0, %s44
    %s46 = sphi 0, %s44
    %s47 = sphi 0, %s46
    %s61 = sphi 0, %s47
    %s67 = sphi 0, %s69
    %s70 = sphi 0, %s67
    %s71 = sphi 0, %s70
    %s87 = sphi 0, %s71
    %s93 = sphi 0, %s95
    %s96 = sphi 0, %s93
    %s97 = sphi 0, %s96
    %s113 = sphi 0, %s97
  $region4: #{basic_block_forward.6} parent=0 // loop_header_branch
    %13 = sbr.rel (%p11) target = $region8
  $region5: #{basic_block_forward.6} parent=0 // loop_body
    %s15 = ssub.s32 %s10, 1
    %s16 = ssub.s32 %s10, 2
    %s17 = sadd.s32 %s10, 1
    %s18 = ssub.s32 %s10, %s17
    %p19 = scmp.eq.s32.totalorder %s18, 0
    %s21 = sadd.s32 %s20, 1
    %s22 = scalar_select %p19, %s20, %s21
    %p25 = pneg %p19
    %p26 = scmp.eq.s32.totalorder %s10, 3
    %p27 = por %p25, %p26
    %p28 = scmp.ne.s32.totalorder %s20, %s23
    %p29 = scmp.eq.s32.totalorder %s10, 0
    %p30 = por %p28, %p29
    %p31 = scmp.ne.s32.totalorder %s20, %s23
    %p32 = scmp.eq.s32.totalorder %s15, 3
    %p33 = por %p31, %p32
    %p34 = scmp.ne.s32.totalorder %s23, %s24
    %p35 = scmp.eq.s32.totalorder %s15, 0
    %p36 = por %p34, %p35
    %p37 = scmp.ne.s32.totalorder %s23, %s24
    %p38 = scmp.eq.s32.totalorder %s16, 3
    %p39 = por %p37, %p38
    %p41 = scmp.ne.s32.totalorder %s24, %s40
    %p42 = scmp.eq.s32.totalorder %s16, 0
    %p43 = por %p41, %p42
    %s45 = sadd.s32 %s44, 1
    %p48 = scmp.eq.s32.totalorder %s10, 3
    %p49 = scmp.ne.s32.totalorder %s44, %s46
    %p50 = scmp.eq.s32.totalorder %s10, 0
    %p51 = por %p49, %p50
    %p52 = scmp.ne.s32.totalorder %s44, %s46
    %p53 = scmp.eq.s32.totalorder %s15, 3
    %p54 = por %p52, %p53
    %p55 = scmp.ne.s32.totalorder %s46, %s47
    %p56 = scmp.eq.s32.totalorder %s15, 0
    %p57 = por %p55, %p56
    %p58 = scmp.ne.s32.totalorder %s46, %s47
    %p59 = scmp.eq.s32.totalorder %s16, 3
    %p60 = por %p58, %p59
    %p62 = scmp.ne.s32.totalorder %s47, %s61
    %p63 = scmp.eq.s32.totalorder %s16, 0
    %p64 = por %p62, %p63
    %s65 = ssub.s32 %s10, %s17
    %p66 = scmp.eq.s32.totalorder %s65, 0
    %s68 = sadd.s32 %s67, 1
    %s69 = scalar_select %p66, %s67, %s68
    %p72 = pneg %p66
    %p73 = scmp.eq.s32.totalorder %s10, 3
    %p74 = por %p72, %p73
    %p75 = scmp.ne.s32.totalorder %s67, %s70
    %p76 = scmp.eq.s32.totalorder %s10, 0
    %p77 = por %p75, %p76
    %p78 = scmp.ne.s32.totalorder %s67, %s70
    %p79 = scmp.eq.s32.totalorder %s15, 3
    %p80 = por %p78, %p79
    %p81 = scmp.ne.s32.totalorder %s70, %s71
    %p82 = scmp.eq.s32.totalorder %s15, 0
    %p83 = por %p81, %p82
    %p84 = scmp.ne.s32.totalorder %s70, %s71
    %p85 = scmp.eq.s32.totalorder %s16, 3
    %p86 = por %p84, %p85
    %p88 = scmp.ne.s32.totalorder %s71, %s87
    %p89 = scmp.eq.s32.totalorder %s16, 0
    %p90 = por %p88, %p89
    %s91 = ssub.s32 %s10, %s17
    %p92 = scmp.eq.s32.totalorder %s91, 0
    %s94 = sadd.s32 %s93, 1
    %s95 = scalar_select %p92, %s93, %s94
    %p98 = pneg %p92
    %p99 = scmp.eq.s32.totalorder %s10, 3
    %p100 = por %p98, %p99
    %p101 = scmp.ne.s32.totalorder %s93, %s96
    %p102 = scmp.eq.s32.totalorder %s10, 0
    %p103 = por %p101, %p102
    %p104 = scmp.ne.s32.totalorder %s93, %s96
    %p105 = scmp.eq.s32.totalorder %s15, 3
    %p106 = por %p104, %p105
    %p107 = scmp.ne.s32.totalorder %s96, %s97
    %p108 = scmp.eq.s32.totalorder %s15, 0
    %p109 = por %p107, %p108
    %p110 = scmp.ne.s32.totalorder %s96, %s97
    %p111 = scmp.eq.s32.totalorder %s16, 3
    %p112 = por %p110, %p111
    %p114 = scmp.ne.s32.totalorder %s97, %s113
    %p115 = scmp.eq.s32.totalorder %s16, 0
    %p116 = por %p114, %p115
    %p117 = scmp.le.s32.totalorder 1, %s10
    %p118 = scmp.lt.s32.totalorder %s10, 5
    %p119 = pnand %p117, %p118
    %p120 = pneg %p119
    // Predicated region
    $region9: #{basic_block_forward.6} parent=5 // pred_check
      _
    $region10: #{basic_block_forward.6} parent=5 // pred_check_branch
      %122 = sbr.rel (%p119) target = $region12
    $region11: #{basic_block_forward.6} parent=5 // pred_region
      %s123 = ssub.s32 %s10, 1
      // Predicated region
      $region13: #{basic_block_forward.6} parent=11 // pred_check
        %p124 = pneg %p57
      $region14: #{basic_block_forward.6} parent=11 // pred_check_branch
        %126 = sbr.rel (%p124) target = $region16
      $region15: #{basic_block_forward.6} parent=11 // pred_region
        _
      $region16: #{basic_block_forward.6} parent=11 // pred_fallthru
        _
    $region12: #{basic_block_forward.6} parent=5 // pred_fallthru
      _
    %p127 = scmp.lt.s32.totalorder %s10, 4
    // Predicated region
    $region17: #{basic_block_forward.6} parent=5 // pred_check
      %p128 = pneg %p127
    $region18: #{basic_block_forward.6} parent=5 // pred_check_branch
      %130 = sbr.rel (%p128) target = $region20
    $region19: #{basic_block_forward.6} parent=5 // pred_region
      // Predicated region
      $region21: #{basic_block_forward.6} parent=19 // pred_check
        %p131 = pneg %p30
      $region22: #{basic_block_forward.6} parent=19 // pred_check_branch
        %133 = sbr.rel (%p131) target = $region24
      $region23: #{basic_block_forward.6} parent=19 // pred_region
        %s134 = smul.u32 4, %s10
        %p135 = scmp.lt.s32.totalorder %s134, 15
        %s136 = scalar_select %p135, %s134, 15
        %s137 = smul.addr %s136, 4
        %s138 = scalar_lea.vmem %s0, %s137
        %s139 = smul.u32 4, %s10
      $region24: #{basic_block_forward.6} parent=19 // pred_fallthru
        _
    $region20: #{basic_block_forward.6} parent=5 // pred_fallthru
      _
    %p140 = scmp.le.s32.totalorder 1, %s10
    %p141 = scmp.lt.s32.totalorder %s10, 5
    %p142 = pnand %p140, %p141
    %p143 = pneg %p142
    // Predicated region
    $region25: #{basic_block_forward.6} parent=5 // pred_check
      _
    $region26: #{basic_block_forward.6} parent=5 // pred_check_branch
      %145 = sbr.rel (%p142) target = $region28
    $region27: #{basic_block_forward.6} parent=5 // pred_region
      %s146 = ssub.s32 %s10, 1
      %s147 = smul.u32 4, %s15
      %p148 = scmp.lt.s32.totalorder %s147, 15
      %s149 = scalar_select %p148, %s147, 15
      %s150 = smul.addr %s149, 4
      %s151 = scalar_lea.vmem %s0, %s150
      %p152 = pneg %p36
      %p153 = pneg %p33
      %p154 = pneg %p57
      %p155 = pneg %p54
      %p156 = pneg %p83
      %p157 = pneg %p80
      %s158 = smul.u32 4, %s15
      %p159 = scmp.lt.s32.totalorder %s158, 15
      %s160 = scalar_select %p159, %s158, 15
      %s161 = smul.addr %s160, 4
      %s162 = scalar_lea.vmem %s2, %s161
      %p163 = pneg %p109
      %p164 = pneg %p106
      %p165 = scmp.lt.s32.totalorder %s15, 3
      %s166 = scalar_select %p165, %s15, 3
      %s167 = smul.addr %s166, 8
      %s168 = scalar_lea.vmem %s3, %s167
      %s169 = smul.u32 4, %s15
      %p170 = scmp.lt.s32.totalorder %s169, 15
      %s171 = scalar_select %p170, %s169, 15
      %s172 = smul.addr %s171, 4
      %s173 = scalar_lea.vmem %s0, %s172
      %s174 = smul.u32 4, %s15
      %s175 = smul.u32 4, %s15
      %p176 = scmp.lt.s32.totalorder %s175, 15
      %s177 = scalar_select %p176, %s175, 15
      %s178 = smul.addr %s177, 4
      %s179 = scalar_lea.vmem %s2, %s178
      %s180 = smul.u32 4, %s15
      %p181 = scmp.lt.s32.totalorder %s15, 3
      %s182 = scalar_select %p181, %s15, 3
      %s183 = smul.addr %s182, 8
      %s184 = scalar_lea.vmem %s3, %s183
      %v185 = vld [vmem:[%s173] sm:$0xf]
      %v186 = vld [vmem:[%s173 + $0x4] sm:$0xf]
      %v187 = vld [vmem:[%s173 + $0x8] sm:$0xf]
      %v188 = vld [vmem:[%s173 + $0xc] sm:$0xf]
      %v189 = vld [vmem:[%s1] sm:$0xf]
      %v190 = vld [vmem:[%s1 + $0x4] sm:$0xf]
      %v191 = vld [vmem:[%s1 + $0x8] sm:$0xf]
      %v192 = vld [vmem:[%s1 + $0xc] sm:$0xf]
      %v193 = vld [vmem:[%s1 + $0x10] sm:$0xf]
      %v194 = vld [vmem:[%s1 + $0x14] sm:$0xf]
      %v195 = vld [vmem:[%s1 + $0x18] sm:$0xf]
      %v196 = vld [vmem:[%s1 + $0x1c] sm:$0xf]
      %v197 = vld [vmem:[%s1 + $0x20] sm:$0xf]
      %v198 = vld [vmem:[%s1 + $0x24] sm:$0xf]
      %v199 = vld [vmem:[%s1 + $0x28] sm:$0xf]
      %v200 = vld [vmem:[%s1 + $0x2c] sm:$0xf]
      %v201 = vld [vmem:[%s1 + $0x30] sm:$0xf]
      %v202 = vld [vmem:[%s1 + $0x34] sm:$0xf]
      %v203 = vld [vmem:[%s1 + $0x38] sm:$0xf]
      %v204 = vld [vmem:[%s1 + $0x3c] sm:$0xf]
      %v209 = vunpack.c.l.b16 %v185
      %v210 = vunpack.c.l.b16 %v186
      %v211 = vunpack.c.l.b16 %v187
      %v212 = vunpack.c.l.b16 %v188
      %v213 = vpack.c.b16 %v210, %v209
      %v214 = vpack.c.b16 %v212, %v211
      %v233 = vunpack.c.l.b16 %v189
      %v234 = vunpack.c.l.b16 %v190
      %v235 = vunpack.c.l.b16 %v191
      %v236 = vunpack.c.l.b16 %v192
      %v237 = vunpack.c.l.b16 %v193
      %v238 = vunpack.c.l.b16 %v194
      %v239 = vunpack.c.l.b16 %v195
      %v240 = vunpack.c.l.b16 %v196
      %v241 = vunpack.c.l.b16 %v197
      %v242 = vunpack.c.l.b16 %v198
      %v243 = vunpack.c.l.b16 %v199
      %v244 = vunpack.c.l.b16 %v200
      %v245 = vunpack.c.l.b16 %v201
      %v246 = vunpack.c.l.b16 %v202
      %v247 = vunpack.c.l.b16 %v203
      %v248 = vunpack.c.l.b16 %v204
      %v249 = vpack.c.b16 %v234, %v233
      %v250 = vpack.c.b16 %v236, %v235
      %v251 = vpack.c.b16 %v238, %v237
      %v252 = vpack.c.b16 %v240, %v239
      %v253 = vpack.c.b16 %v242, %v241
      %v254 = vpack.c.b16 %v244, %v243
      %v255 = vpack.c.b16 %v246, %v245
      %v256 = vpack.c.b16 %v248, %v247
      %265 = vmatpush.bf16.msra.mxu0 %v256
      %266 = vmatpush.bf16.msra.mxu0 %v255
      %267 = vmatpush.bf16.msra.mxu0 %v254
      %268 = vmatpush.bf16.msra.mxu0 %v253
      %269 = vmatpush.bf16.msra.mxu0 %v252
      %270 = vmatpush.bf16.msra.mxu0 %v251
      %271 = vmatpush.bf16.msra.mxu0 %v250
      %272 = vmatpush.bf16.msra.mxu0 %v249
      %273 = vmatmul.bf16.gmra.mxu0 %v213
      %v274 = vpop.f32.mrf.mxu0
      %v275 = vadd.f32 0.0, %v274
      %v276 = vpop.f32.mrf.mxu0
      %v277 = vadd.f32 0.0, %v276
      %278 = vmatmul.bf16.gmra.mxu0 %v214
      %v279 = vpop.f32.mrf.mxu0
      %v280 = vadd.f32 0.0, %v279
      %v281 = vpop.f32.mrf.mxu0
      %v282 = vadd.f32 0.0, %v281
      %283 = vdwg.mxu0
      %v284 = vpack.c.bf16 %v275, %v275
      %v285 = vpack.c.bf16 %v277, %v277
      %v286 = vpack.c.bf16 %v280, %v280
      %v287 = vpack.c.bf16 %v282, %v282
      %288 = vst [vmem:[%s179] sm:$0xf] %v284
      %289 = vst [vmem:[%s179 + $0x4] sm:$0xf] %v285
      %290 = vst [vmem:[%s179 + $0x8] sm:$0xf] %v286
      %291 = vst [vmem:[%s179 + $0xc] sm:$0xf] %v287
      %v292 = vadd.f32 %v275, %v277
      %v293 = vadd.f32 %v292, %v280
      %v294 = vadd.f32 %v293, %v282
      %v295 = vrot.slane %v294, 4
      %v296 = vadd.f32 %v294, %v295
      %v297 = vrot.slane %v296, 2
      %v298 = vadd.f32 %v296, %v297
      %v299 = vrot.slane %v298, 1
      %v300 = vadd.f32 %v298, %v299
      %v301 = vmul.f32 %v275, %v275
      %v302 = vmul.f32 %v277, %v277
      %v303 = vmul.f32 %v280, %v280
      %v304 = vmul.f32 %v282, %v282
      %v305 = vadd.f32 %v301, %v302
      %v306 = vadd.f32 %v305, %v303
      %v307 = vadd.f32 %v306, %v304
      %v308 = vrot.slane %v307, 4
      %v309 = vadd.f32 %v307, %v308
      %v310 = vrot.slane %v309, 2
      %v311 = vadd.f32 %v309, %v310
      %v312 = vrot.slane %v311, 1
      %v313 = vadd.f32 %v311, %v312
      %v314 = vlaneseq
      %v315 = vshrl.u32 %v314, 7
      %vm316 = vcmp.eq.s32.totalorder %v315, 0
      %vm317 = vcmp.eq.s32.totalorder %v315, 1
      %v318 = vsel %vm317, %v313, 0.0
      %v319 = vsel %vm316, %v300, %v318
      %320 = vst [vmem:[%s184] sm:$0xff] %v319
      %s321 = smul.u32 4, %s15
      %p322 = scmp.lt.s32.totalorder %s321, 15
      %s323 = scalar_select %p322, %s321, 15
      %s324 = smul.addr %s323, 4
      %s325 = scalar_lea.vmem %s2, %s324
      %p326 = scmp.lt.s32.totalorder %s15, 3
      %s327 = scalar_select %p326, %s15, 3
      %s328 = smul.addr %s327, 8
      %s329 = scalar_lea.vmem %s3, %s328
      // Predicated region
      $region29: #{basic_block_forward.6} parent=27 // pred_check
        %p330 = pneg %p80
      $region30: #{basic_block_forward.6} parent=27 // pred_check_branch
        %332 = sbr.rel (%p330) target = $region32
      $region31: #{basic_block_forward.6} parent=27 // pred_region
        %s333 = smul.u32 4, %s15
      $region32: #{basic_block_forward.6} parent=27 // pred_fallthru
        _
      // Predicated region
      $region33: #{basic_block_forward.6} parent=27 // pred_check
        %p334 = pneg %p106
      $region34: #{basic_block_forward.6} parent=27 // pred_check_branch
        %336 = sbr.rel (%p334) target = $region36
      $region35: #{basic_block_forward.6} parent=27 // pred_region
        _
      $region36: #{basic_block_forward.6} parent=27 // pred_fallthru
        _
    $region28: #{basic_block_forward.6} parent=5 // pred_fallthru
      _
    %p337 = scmp.le.s32.totalorder 2, %s10
    // Predicated region
    $region37: #{basic_block_forward.6} parent=5 // pred_check
      %p338 = pneg %p337
    $region38: #{basic_block_forward.6} parent=5 // pred_check_branch
      %340 = sbr.rel (%p338) target = $region40
    $region39: #{basic_block_forward.6} parent=5 // pred_region
      %s341 = ssub.s32 %s10, 2
      // Predicated region
      $region41: #{basic_block_forward.6} parent=39 // pred_check
        %p342 = pneg %p86
      $region42: #{basic_block_forward.6} parent=39 // pred_check_branch
        %344 = sbr.rel (%p342) target = $region44
      $region43: #{basic_block_forward.6} parent=39 // pred_region
        %s345 = smul.u32 4, %s16
        %p346 = scmp.lt.s32.totalorder %s345, 15
        %s347 = scalar_select %p346, %s345, 15
        %s348 = smul.addr %s347, 4
        %s349 = scalar_lea.vmem %s2, %s348
      $region44: #{basic_block_forward.6} parent=39 // pred_fallthru
        _
      // Predicated region
      $region45: #{basic_block_forward.6} parent=39 // pred_check
        %p350 = pneg %p112
      $region46: #{basic_block_forward.6} parent=39 // pred_check_branch
        %352 = sbr.rel (%p350) target = $region48
      $region47: #{basic_block_forward.6} parent=39 // pred_region
        %p353 = scmp.lt.s32.totalorder %s16, 3
        %s354 = scalar_select %p353, %s16, 3
        %s355 = smul.addr %s354, 8
        %s356 = scalar_lea.vmem %s3, %s355
      $region48: #{basic_block_forward.6} parent=39 // pred_fallthru
        _
    $region40: #{basic_block_forward.6} parent=5 // pred_fallthru
      _
  $region6: #{basic_block_forward.6} parent=0 // loop_footer
    %s14 = sadd.s32 1, %s10
  $region7: #{basic_block_forward.6} parent=0 // loop_footer_branch
    %9 = sbr.rel target = $region3
  $region8: #{basic_block_forward.6} parent=0 // loop_exit
    _

// kernel: basic_block_forward.7
$region0: #{basic_block_forward.7}
  #allocation0 [shape = 'u32[]', space=smem, size = 0x4, offset = 0x4, fixed_abs, tag = 'smem constant byte address 0x4 - core index']
  #allocation1 [shape = 'u32[72,128]{1,0:T(1,128)}', space=vmem, size = 0x9000, scoped, tag = 'internal scratch']
  %s0 = inlined_call_operand.vmem [shape: bf16[128,128], index: 0, kind: input, shape index: {}]
  %s1 = inlined_call_operand.vmem [shape: bf16[128,128], index: 1, kind: input, shape index: {}]
  %s2 = inlined_call_operand.vmem [shape: f32[1,128], index: 2, kind: input, shape index: {}]
  %s3 = inlined_call_operand.vmem [shape: f32[1,128], index: 3, kind: input, shape index: {}]
  %s4 = inlined_call_operand.vmem [shape: f32[1,128], index: 4, kind: input, shape index: {}]
  %s5 = inlined_call_operand.vmem [shape: bf16[128,128], index: 5, kind: output, shape index: {}]
  %s6 = sld [smem:[#allocation0]]
  $region53: #{basic_block_forward.7} parent=0
    _
  %s8 = ssub.s32 1, %s6
  %s9 = scalar_select 0, %s8, %s6
  loop: start=0, step=1, limit=6
  $region2: #{basic_block_forward.7} parent=0 // loop_pre_header
    _
  $region3: #{basic_block_forward.7} parent=0 // loop_header
    %s11 = sphi 0, %s15
    %p12 = scmp.ge.s32.totalorder %s11, 6
    %s21 = sphi 0, %s23
    %s24 = sphi 0, %s21
    %s25 = sphi 0, %s24
    %s41 = sphi 0, %s25
    %s47 = sphi 0, %s49
    %s50 = sphi 0, %s47
    %s51 = sphi 0, %s50
    %s67 = sphi 0, %s51
    %s71 = sphi 0, %s71
    %s73 = sphi 0, %s71
    %s74 = sphi 0, %s73
    %s88 = sphi 0, %s74
    %s92 = sphi 0, %s92
    %s94 = sphi 0, %s92
    %s95 = sphi 0, %s94
    %s109 = sphi 0, %s95
    %s113 = sphi 0, %s113
    %s115 = sphi 0, %s113
    %s116 = sphi 0, %s115
    %s130 = sphi 0, %s116
    %s136 = sphi 0, %s138
    %s139 = sphi 0, %s136
    %s140 = sphi 0, %s139
    %s156 = sphi 0, %s140
  $region4: #{basic_block_forward.7} parent=0 // loop_header_branch
    %14 = sbr.rel (%p12) target = $region8
  $region5: #{basic_block_forward.7} parent=0 // loop_body
    %s16 = ssub.s32 %s11, 1
    %s17 = ssub.s32 %s11, 2
    %s18 = sadd.s32 %s11, 1
    %s19 = ssub.s32 %s11, %s18
    %p20 = scmp.eq.s32.totalorder %s19, 0
    %s22 = sadd.s32 %s21, 1
    %s23 = scalar_select %p20, %s21, %s22
    %p26 = pneg %p20
    %p27 = scmp.eq.s32.totalorder %s11, 3
    %p28 = por %p26, %p27
    %p29 = scmp.ne.s32.totalorder %s21, %s24
    %p30 = scmp.eq.s32.totalorder %s11, 0
    %p31 = por %p29, %p30
    %p32 = scmp.ne.s32.totalorder %s21, %s24
    %p33 = scmp.eq.s32.totalorder %s16, 3
    %p34 = por %p32, %p33
    %p35 = scmp.ne.s32.totalorder %s24, %s25
    %p36 = scmp.eq.s32.totalorder %s16, 0
    %p37 = por %p35, %p36
    %p38 = scmp.ne.s32.totalorder %s24, %s25
    %p39 = scmp.eq.s32.totalorder %s17, 3
    %p40 = por %p38, %p39
    %p42 = scmp.ne.s32.totalorder %s25, %s41
    %p43 = scmp.eq.s32.totalorder %s17, 0
    %p44 = por %p42, %p43
    %s45 = ssub.s32 %s11, %s18
    %p46 = scmp.eq.s32.totalorder %s45, 0
    %s48 = sadd.s32 %s47, 1
    %s49 = scalar_select %p46, %s47, %s48
    %p52 = pneg %p46
    %p53 = scmp.eq.s32.totalorder %s11, 3
    %p54 = por %p52, %p53
    %p55 = scmp.ne.s32.totalorder %s47, %s50
    %p56 = scmp.eq.s32.totalorder %s11, 0
    %p57 = por %p55, %p56
    %p58 = scmp.ne.s32.totalorder %s47, %s50
    %p59 = scmp.eq.s32.totalorder %s16, 3
    %p60 = por %p58, %p59
    %p61 = scmp.ne.s32.totalorder %s50, %s51
    %p62 = scmp.eq.s32.totalorder %s16, 0
    %p63 = por %p61, %p62
    %p64 = scmp.ne.s32.totalorder %s50, %s51
    %p65 = scmp.eq.s32.totalorder %s17, 3
    %p66 = por %p64, %p65
    %p68 = scmp.ne.s32.totalorder %s51, %s67
    %p69 = scmp.eq.s32.totalorder %s17, 0
    %p70 = por %p68, %p69
    %s72 = sadd.s32 %s71, 1
    %p75 = scmp.eq.s32.totalorder %s11, 3
    %p76 = scmp.ne.s32.totalorder %s71, %s73
    %p77 = scmp.eq.s32.totalorder %s11, 0
    %p78 = por %p76, %p77
    %p79 = scmp.ne.s32.totalorder %s71, %s73
    %p80 = scmp.eq.s32.totalorder %s16, 3
    %p81 = por %p79, %p80
    %p82 = scmp.ne.s32.totalorder %s73, %s74
    %p83 = scmp.eq.s32.totalorder %s16, 0
    %p84 = por %p82, %p83
    %p85 = scmp.ne.s32.totalorder %s73, %s74
    %p86 = scmp.eq.s32.totalorder %s17, 3
    %p87 = por %p85, %p86
    %p89 = scmp.ne.s32.totalorder %s74, %s88
    %p90 = scmp.eq.s32.totalorder %s17, 0
    %p91 = por %p89, %p90
    %s93 = sadd.s32 %s92, 1
    %p96 = scmp.eq.s32.totalorder %s11, 3
    %p97 = scmp.ne.s32.totalorder %s92, %s94
    %p98 = scmp.eq.s32.totalorder %s11, 0
    %p99 = por %p97, %p98
    %p100 = scmp.ne.s32.totalorder %s92, %s94
    %p101 = scmp.eq.s32.totalorder %s16, 3
    %p102 = por %p100, %p101
    %p103 = scmp.ne.s32.totalorder %s94, %s95
    %p104 = scmp.eq.s32.totalorder %s16, 0
    %p105 = por %p103, %p104
    %p106 = scmp.ne.s32.totalorder %s94, %s95
    %p107 = scmp.eq.s32.totalorder %s17, 3
    %p108 = por %p106, %p107
    %p110 = scmp.ne.s32.totalorder %s95, %s109
    %p111 = scmp.eq.s32.totalorder %s17, 0
    %p112 = por %p110, %p111
    %s114 = sadd.s32 %s113, 1
    %p117 = scmp.eq.s32.totalorder %s11, 3
    %p118 = scmp.ne.s32.totalorder %s113, %s115
    %p119 = scmp.eq.s32.totalorder %s11, 0
    %p120 = por %p118, %p119
    %p121 = scmp.ne.s32.totalorder %s113, %s115
    %p122 = scmp.eq.s32.totalorder %s16, 3
    %p123 = por %p121, %p122
    %p124 = scmp.ne.s32.totalorder %s115, %s116
    %p125 = scmp.eq.s32.totalorder %s16, 0
    %p126 = por %p124, %p125
    %p127 = scmp.ne.s32.totalorder %s115, %s116
    %p128 = scmp.eq.s32.totalorder %s17, 3
    %p129 = por %p127, %p128
    %p131 = scmp.ne.s32.totalorder %s116, %s130
    %p132 = scmp.eq.s32.totalorder %s17, 0
    %p133 = por %p131, %p132
    %s134 = ssub.s32 %s11, %s18
    %p135 = scmp.eq.s32.totalorder %s134, 0
    %s137 = sadd.s32 %s136, 1
    %s138 = scalar_select %p135, %s136, %s137
    %p141 = pneg %p135
    %p142 = scmp.eq.s32.totalorder %s11, 3
    %p143 = por %p141, %p142
    %p144 = scmp.ne.s32.totalorder %s136, %s139
    %p145 = scmp.eq.s32.totalorder %s11, 0
    %p146 = por %p144, %p145
    %p147 = scmp.ne.s32.totalorder %s136, %s139
    %p148 = scmp.eq.s32.totalorder %s16, 3
    %p149 = por %p147, %p148
    %p150 = scmp.ne.s32.totalorder %s139, %s140
    %p151 = scmp.eq.s32.totalorder %s16, 0
    %p152 = por %p150, %p151
    %p153 = scmp.ne.s32.totalorder %s139, %s140
    %p154 = scmp.eq.s32.totalorder %s17, 3
    %p155 = por %p153, %p154
    %p157 = scmp.ne.s32.totalorder %s140, %s156
    %p158 = scmp.eq.s32.totalorder %s17, 0
    %p159 = por %p157, %p158
    %p160 = scmp.le.s32.totalorder 1, %s11
    %p161 = scmp.lt.s32.totalorder %s11, 5
    %p162 = pnand %p160, %p161
    %p163 = pneg %p162
    // Predicated region
    $region9: #{basic_block_forward.7} parent=5 // pred_check
      _
    $region10: #{basic_block_forward.7} parent=5 // pred_check_branch
      %165 = sbr.rel (%p162) target = $region12
    $region11: #{basic_block_forward.7} parent=5 // pred_region
      %s166 = ssub.s32 %s11, 1
      // Predicated region
      $region13: #{basic_block_forward.7} parent=11 // pred_check
        %p167 = pneg %p84
      $region14: #{basic_block_forward.7} parent=11 // pred_check_branch
        %169 = sbr.rel (%p167) target = $region16
      $region15: #{basic_block_forward.7} parent=11 // pred_region
        _
      $region16: #{basic_block_forward.7} parent=11 // pred_fallthru
        _
      // Predicated region
      $region17: #{basic_block_forward.7} parent=11 // pred_check
        %p170 = pneg %p105
      $region18: #{basic_block_forward.7} parent=11 // pred_check_branch
        %172 = sbr.rel (%p170) target = $region20
      $region19: #{basic_block_forward.7} parent=11 // pred_region
        _
      $region20: #{basic_block_forward.7} parent=11 // pred_fallthru
        _
      // Predicated region
      $region21: #{basic_block_forward.7} parent=11 // pred_check
        %p173 = pneg %p126
      $region22: #{basic_block_forward.7} parent=11 // pred_check_branch
        %175 = sbr.rel (%p173) target = $region24
      $region23: #{basic_block_forward.7} parent=11 // pred_region
        _
      $region24: #{basic_block_forward.7} parent=11 // pred_fallthru
        _
    $region12: #{basic_block_forward.7} parent=5 // pred_fallthru
      _
    %p176 = scmp.lt.s32.totalorder %s11, 4
    // Predicated region
    $region25: #{basic_block_forward.7} parent=5 // pred_check
      %p177 = pneg %p176
    $region26: #{basic_block_forward.7} parent=5 // pred_check_branch
      %179 = sbr.rel (%p177) target = $region28
    $region27: #{basic_block_forward.7} parent=5 // pred_region
      // Predicated region
      $region29: #{basic_block_forward.7} parent=27 // pred_check
        %p180 = pneg %p31
      $region30: #{basic_block_forward.7} parent=27 // pred_check_branch
        %182 = sbr.rel (%p180) target = $region32
      $region31: #{basic_block_forward.7} parent=27 // pred_region
        %s183 = smul.u32 4, %s11
        %p184 = scmp.lt.s32.totalorder %s183, 15
        %s185 = scalar_select %p184, %s183, 15
        %s186 = smul.addr %s185, 4
        %s187 = scalar_lea.vmem %s0, %s186
        %s188 = smul.u32 4, %s11
      $region32: #{basic_block_forward.7} parent=27 // pred_fallthru
        _
      // Predicated region
      $region33: #{basic_block_forward.7} parent=27 // pred_check
        %p189 = pneg %p57
      $region34: #{basic_block_forward.7} parent=27 // pred_check_branch
        %191 = sbr.rel (%p189) target = $region36
      $region35: #{basic_block_forward.7} parent=27 // pred_region
        %s192 = smul.u32 4, %s11
        %p193 = scmp.lt.s32.totalorder %s192, 15
        %s194 = scalar_select %p193, %s192, 15
        %s195 = smul.addr %s194, 4
        %s196 = scalar_lea.vmem %s1, %s195
        %s197 = smul.u32 4, %s11
      $region36: #{basic_block_forward.7} parent=27 // pred_fallthru
        _
    $region28: #{basic_block_forward.7} parent=5 // pred_fallthru
      _
    %p198 = scmp.le.s32.totalorder 1, %s11
    %p199 = scmp.lt.s32.totalorder %s11, 5
    %p200 = pnand %p198, %p199
    %p201 = pneg %p200
    // Predicated region
    $region37: #{basic_block_forward.7} parent=5 // pred_check
      _
    $region38: #{basic_block_forward.7} parent=5 // pred_check_branch
      %203 = sbr.rel (%p200) target = $region40
    $region39: #{basic_block_forward.7} parent=5 // pred_region
      %s204 = ssub.s32 %s11, 1
      %s205 = smul.u32 4, %s16
      %p206 = scmp.lt.s32.totalorder %s205, 15
      %s207 = scalar_select %p206, %s205, 15
      %s208 = smul.addr %s207, 4
      %s209 = scalar_lea.vmem %s0, %s208
      %p210 = pneg %p37
      %p211 = pneg %p34
      %s212 = smul.u32 4, %s16
      %p213 = scmp.lt.s32.totalorder %s212, 15
      %s214 = scalar_select %p213, %s212, 15
      %s215 = smul.addr %s214, 4
      %s216 = scalar_lea.vmem %s1, %s215
      %p217 = pneg %p63
      %p218 = pneg %p60
      %p219 = pneg %p84
      %p220 = pneg %p81
      %p221 = pneg %p105
      %p222 = pneg %p102
      %p223 = pneg %p126
      %p224 = pneg %p123
      %p225 = pneg %p152
      %p226 = pneg %p149
      %s227 = smul.u32 4, %s16
      %p228 = scmp.lt.s32.totalorder %s227, 15
      %s229 = scalar_select %p228, %s227, 15
      %s230 = smul.addr %s229, 4
      %s231 = scalar_lea.vmem %s5, %s230
      %s232 = smul.u32 4, %s16
      %p233 = scmp.lt.s32.totalorder %s232, 15
      %s234 = scalar_select %p233, %s232, 15
      %s235 = smul.addr %s234, 4
      %s236 = scalar_lea.vmem %s0, %s235
      %s237 = smul.u32 4, %s16
      %s238 = smul.u32 4, %s16
      %p239 = scmp.lt.s32.totalorder %s238, 15
      %s240 = scalar_select %p239, %s238, 15
      %s241 = smul.addr %s240, 4
      %s242 = scalar_lea.vmem %s1, %s241
      %s243 = smul.u32 4, %s16
      %s244 = smul.u32 4, %s16
      %p245 = scmp.lt.s32.totalorder %s244, 15
      %s246 = scalar_select %p245, %s244, 15
      %s247 = smul.addr %s246, 4
      %s248 = scalar_lea.vmem %s5, %s247
      %s249 = smul.u32 4, %s16
      %v250 = vld [vmem:[%s236] sm:$0xf]
      %v251 = vld [vmem:[%s236 + $0x4] sm:$0xf]
      %v252 = vld [vmem:[%s236 + $0x8] sm:$0xf]
      %v253 = vld [vmem:[%s236 + $0xc] sm:$0xf]
      %v254 = vunpack.c.l.bf16 %v250
      %v255 = vunpack.c.l.bf16 %v251
      %v256 = vunpack.c.l.bf16 %v252
      %v257 = vunpack.c.l.bf16 %v253
      %v258 = vld [vmem:[%s242] sm:$0xf]
      %v259 = vld [vmem:[%s242 + $0x4] sm:$0xf]
      %v260 = vld [vmem:[%s242 + $0x8] sm:$0xf]
      %v261 = vld [vmem:[%s242 + $0xc] sm:$0xf]
      %v262 = vunpack.c.l.bf16 %v258
      %v263 = vunpack.c.l.bf16 %v259
      %v264 = vunpack.c.l.bf16 %v260
      %v265 = vunpack.c.l.bf16 %v261
      %v266 = vld [vmem:[%s2] sm:$0x1]
      %v268 = vperm.slane %v266, 0
      %v270 = vmul.f32 %v254, %v268
      %v271 = vmul.f32 %v255, %v268
      %v272 = vmul.f32 %v256, %v268
      %v273 = vmul.f32 %v257, %v268
      %v274 = vld [vmem:[%s3] sm:$0x1]
      %v276 = vperm.slane %v274, 0
      %v278 = vmul.f32 %v262, %v276
      %v279 = vmul.f32 %v263, %v276
      %v280 = vmul.f32 %v264, %v276
      %v281 = vmul.f32 %v265, %v276
      %v282 = vadd.f32 %v270, %v278
      %v283 = vadd.f32 %v271, %v279
      %v284 = vadd.f32 %v272, %v280
      %v285 = vadd.f32 %v273, %v281
      %v286 = vld [vmem:[%s4] sm:$0x1]
      %v288 = vperm.slane %v286, 0
      %v290 = vadd.f32 %v282, %v288
      %v291 = vadd.f32 %v283, %v288
      %v292 = vadd.f32 %v284, %v288
      %v293 = vadd.f32 %v285, %v288
      %v294 = vmax.f32 %v290, 0.0
      %v295 = vmax.f32 %v291, 0.0
      %v296 = vmax.f32 %v292, 0.0
      %v297 = vmax.f32 %v293, 0.0
      %v298 = vpack.c.bf16 %v294, %v294
      %v299 = vpack.c.bf16 %v295, %v295
      %v300 = vpack.c.bf16 %v296, %v296
      %v301 = vpack.c.bf16 %v297, %v297
      %302 = vst [vmem:[%s248] sm:$0xf] %v298
      %303 = vst [vmem:[%s248 + $0x4] sm:$0xf] %v299
      %304 = vst [vmem:[%s248 + $0x8] sm:$0xf] %v300
      %305 = vst [vmem:[%s248 + $0xc] sm:$0xf] %v301
      %s306 = smul.u32 4, %s16
      %p307 = scmp.lt.s32.totalorder %s306, 15
      %s308 = scalar_select %p307, %s306, 15
      %s309 = smul.addr %s308, 4
      %s310 = scalar_lea.vmem %s5, %s309
      // Predicated region
      $region41: #{basic_block_forward.7} parent=39 // pred_check
        %p311 = pneg %p149
      $region42: #{basic_block_forward.7} parent=39 // pred_check_branch
        %313 = sbr.rel (%p311) target = $region44
      $region43: #{basic_block_forward.7} parent=39 // pred_region
        %s314 = smul.u32 4, %s16
      $region44: #{basic_block_forward.7} parent=39 // pred_fallthru
        _
    $region40: #{basic_block_forward.7} parent=5 // pred_fallthru
      _
    %p315 = scmp.le.s32.totalorder 2, %s11
    // Predicated region
    $region45: #{basic_block_forward.7} parent=5 // pred_check
      %p316 = pneg %p315
    $region46: #{basic_block_forward.7} parent=5 // pred_check_branch
      %318 = sbr.rel (%p316) target = $region48
    $region47: #{basic_block_forward.7} parent=5 // pred_region
      %s319 = ssub.s32 %s11, 2
      // Predicated region
      $region49: #{basic_block_forward.7} parent=47 // pred_check
        %p320 = pneg %p155
      $region50: #{basic_block_forward.7} parent=47 // pred_check_branch
        %322 = sbr.rel (%p320) target = $region52
      $region51: #{basic_block_forward.7} parent=47 // pred_region
        %s323 = smul.u32 4, %s17
        %p324 = scmp.lt.s32.totalorder %s323, 15
        %s325 = scalar_select %p324, %s323, 15
        %s326 = smul.addr %s325, 4
        %s327 = scalar_lea.vmem %s5, %s326
      $region52: #{basic_block_forward.7} parent=47 // pred_fallthru
        _
    $region48: #{basic_block_forward.7} parent=5 // pred_fallthru
      _
  $region6: #{basic_block_forward.7} parent=0 // loop_footer
    %s15 = sadd.s32 1, %s11
  $region7: #{basic_block_forward.7} parent=0 // loop_footer_branch
    %10 = sbr.rel target = $region3
  $region8: #{basic_block_forward.7} parent=0 // loop_exit
    _

</llo_original>
